<compile_context>
chip_gen: v7x
topology: tpu7x:2x2x1
jax: 0.10.0
libtpu: 0.0.40
codegen_flags: <defaults>
</compile_context>

<pallas_src>
import math

import jax
import jax.numpy as jnp
from jax.experimental import pallas as pl
from jax.experimental.pallas import tpu as pltpu


def _meta_opt_kernel(w_ref, b_ref, x_ref, o_ref):
    """linear(6->2) + sigmoid on one lane-dense tile.

    w_ref: SMEM (12,) f32, row-major (out, in) — PyTorch weight flattened.
    b_ref: SMEM (2,)  f32.
    x_ref: VMEM (6, TILE_N) f32 (features on sublanes, samples on lanes).
    o_ref: VMEM (2, TILE_N) f32 (row 0 = f gate, row 1 = i gate).
    """
    rows = [x_ref[k:k + 1, :] for k in range(6)]        # each (1, TILE_N)
    for j in range(2):                                   # the 2 gates (f, i)
        z = rows[0] * w_ref[6 * j + 0]
        for k in range(1, 6):
            z = z + rows[k] * w_ref[6 * j + k]
        o_ref[j:j + 1, :] = jax.nn.sigmoid(z + b_ref[j])


def _round_up(v, m):
    return ((v + m - 1) // m) * m


def fast_meta_optimizer_forward(x, weight, bias, *, tile_n=None):
    """Pallas equivalent of FastMetaOptimizer.forward.

    Args:
      x:      (N, 6) float32 inputs (one row per model parameter).
      weight: (2, 6) float32, nn.Linear(6, 2) weight in PyTorch layout.
      bias:   (2,)   float32 bias (bias[0] == 1.0 as in the module init).
      tile_n: lane tile size (multiple of 128). Default sizes itself so the
              double-buffered in+out tiles stay small on all TPU generations.

    Returns:
      (f, i): two (N, 1) float32 arrays, matching x.split(1, 1) in PyTorch.
    """
    n = x.shape[0]
    if tile_n is None:
        # 64K lanes -> (6+2)*64K*4 B = 2 MiB per buffer pair, ~4 MiB double
        # buffered: comfortably inside v5e's 16 MiB / v7x's 32 MiB scoped VMEM.
        tile_n = min(65536, _round_up(n, 128))
    tile_n = max(128, _round_up(tile_n, 128))
    n_pad = _round_up(max(n, tile_n), tile_n)

    # Layout plumbing in the wrapper: N onto the lane axis, zero-pad to tiles.
    xt = jnp.transpose(x.astype(jnp.float32))            # (6, N)
    if n_pad != n:
        xt = jnp.pad(xt, ((0, 0), (0, n_pad - n)))
    w_flat = weight.astype(jnp.float32).reshape(-1)       # (12,)
    b_flat = bias.astype(jnp.float32).reshape(-1)         # (2,)

    grid = (n_pad // tile_n,)
    out = pl.pallas_call(
        _meta_opt_kernel,
        out_shape=jax.ShapeDtypeStruct((2, n_pad), jnp.float32),
        grid=grid,
        in_specs=[
            pl.BlockSpec(memory_space=pltpu.MemorySpace.SMEM),    # weights (12,)
            pl.BlockSpec(memory_space=pltpu.MemorySpace.SMEM),    # bias (2,)
            pl.BlockSpec((6, tile_n), lambda i: (0, i)),          # x tile
        ],
        out_specs=pl.BlockSpec((2, tile_n), lambda i: (0, i)),
        compiler_params=pltpu.CompilerParams(
            dimension_semantics=("parallel",),
        ),
        cost_estimate=pl.CostEstimate(
            flops=2 * 6 * 2 * n_pad,
            transcendentals=2 * n_pad,
            bytes_accessed=(6 + 2) * 4 * n_pad,
        ),
    )(w_flat, b_flat, xt)

    out = out[:, :n]                    # drop the pad columns  -> (2, N)
    # split(1, 1): chunks of size 1 along dim 1 of the (N, 2) activation.
    f = jnp.transpose(out[0:1, :])      # (N, 1)
    i = jnp.transpose(out[1:2, :])      # (N, 1)
    return f, i


def init_params(key):
    """Deterministic init mimicking nn.Linear(6, 2) defaults + bias[0] = 1."""
    in_features, out_features = 6, 2
    bound = 1.0 / math.sqrt(in_features)
    k_w, k_b = jax.random.split(key)
    weight = jax.random.uniform(
        k_w, (out_features, in_features), jnp.float32, -bound, bound
    )
    bias = jax.random.uniform(k_b, (out_features,), jnp.float32, -bound, bound)
    bias = bias.at[0].set(1.0)  # self.linear1.bias.data[0] = 1
    return weight, bias


# TODO(synk): reset_lstm / meta_update are host-side state & parameter plumbing
# around the meta_model (no tensor compute beyond this forward); not kernelized.


if __name__ == "__main__":
    key = jax.random.PRNGKey(0)
    k_params, k_x = jax.random.split(key)

    weight, bias = init_params(k_params)

    # x: a batch of "parameter rows", each with the 6 meta-features
    # [preprocess_gradients(g) (2 cols), flat_params, loss, f, i].
    n = 1000
    x = jax.random.normal(k_x, (n, 6), dtype=jnp.float32)

    # tile_n=256 so this small demo exercises a multi-step (pipelined) grid.
    f, i = fast_meta_optimizer_forward(x, weight, bias, tile_n=256)
    jax.block_until_ready((f, i))

    # Sanity check against plain JAX reference.
    ref = jax.nn.sigmoid(x @ weight.T + bias)
    ref_f, ref_i = ref[:, 0:1], ref[:, 1:2]
    assert f.shape == (n, 1) and i.shape == (n, 1)
    assert jnp.allclose(f, ref_f, atol=1e-5)
    assert jnp.allclose(i, ref_i, atol=1e-5)

    print("KERNEL_OK")
</pallas_src>

<mosaic_0001>
module attributes {stable_mosaic.version = 11 : i64} {
  func.func @_meta_opt_kernel(%arg0: i32, %arg1: memref<12xf32, #tpu.memory_space<smem>>, %arg2: memref<2xf32, #tpu.memory_space<smem>>, %arg3: memref<6x256xf32, #tpu.memory_space<vmem>>, %arg4: memref<2x256xf32, #tpu.memory_space<vmem>>) attributes {dimension_semantics = [#tpu.dimension_semantics<parallel>], iteration_bounds = array<i64: 4>, scalar_prefetch = 0 : i64, scratch_operands = 0 : i64, tpu.core_type = #tpu.core_type<tc>, window_params = [{transform_indices = @transform_0, window_bounds = array<i64: 12>}, {transform_indices = @transform_1, window_bounds = array<i64: 2>}, {transform_indices = @transform_2, window_bounds = array<i64: 6, 256>}, {transform_indices = @transform_3, window_bounds = array<i64: 2, 256>}]} {
    %c0 = arith.constant 0 : index
    %c0_0 = arith.constant 0 : index
    %0 = vector.load %arg3[%c0, %c0_0] : memref<6x256xf32, #tpu.memory_space<vmem>>, vector<1x256xf32>
    %c1 = arith.constant 1 : index
    %c0_1 = arith.constant 0 : index
    %1 = vector.load %arg3[%c1, %c0_1] : memref<6x256xf32, #tpu.memory_space<vmem>>, vector<1x256xf32>
    %c2 = arith.constant 2 : index
    %c0_2 = arith.constant 0 : index
    %2 = vector.load %arg3[%c2, %c0_2] : memref<6x256xf32, #tpu.memory_space<vmem>>, vector<1x256xf32>
    %c3 = arith.constant 3 : index
    %c0_3 = arith.constant 0 : index
    %3 = vector.load %arg3[%c3, %c0_3] : memref<6x256xf32, #tpu.memory_space<vmem>>, vector<1x256xf32>
    %c4 = arith.constant 4 : index
    %c0_4 = arith.constant 0 : index
    %4 = vector.load %arg3[%c4, %c0_4] : memref<6x256xf32, #tpu.memory_space<vmem>>, vector<1x256xf32>
    %c5 = arith.constant 5 : index
    %c0_5 = arith.constant 0 : index
    %5 = vector.load %arg3[%c5, %c0_5] : memref<6x256xf32, #tpu.memory_space<vmem>>, vector<1x256xf32>
    %c0_6 = arith.constant 0 : index
    %6 = memref.load %arg1[%c0_6] : memref<12xf32, #tpu.memory_space<smem>>
    %7 = vector.broadcast %6 : f32 to vector<1x256xf32>
    %8 = arith.mulf %0, %7 : vector<1x256xf32>
    %c1_7 = arith.constant 1 : index
    %9 = memref.load %arg1[%c1_7] : memref<12xf32, #tpu.memory_space<smem>>
    %10 = vector.broadcast %9 : f32 to vector<1x256xf32>
    %11 = arith.mulf %1, %10 : vector<1x256xf32>
    %12 = arith.addf %8, %11 : vector<1x256xf32>
    %c2_8 = arith.constant 2 : index
    %13 = memref.load %arg1[%c2_8] : memref<12xf32, #tpu.memory_space<smem>>
    %14 = vector.broadcast %13 : f32 to vector<1x256xf32>
    %15 = arith.mulf %2, %14 : vector<1x256xf32>
    %16 = arith.addf %12, %15 : vector<1x256xf32>
    %c3_9 = arith.constant 3 : index
    %17 = memref.load %arg1[%c3_9] : memref<12xf32, #tpu.memory_space<smem>>
    %18 = vector.broadcast %17 : f32 to vector<1x256xf32>
    %19 = arith.mulf %3, %18 : vector<1x256xf32>
    %20 = arith.addf %16, %19 : vector<1x256xf32>
    %c4_10 = arith.constant 4 : index
    %21 = memref.load %arg1[%c4_10] : memref<12xf32, #tpu.memory_space<smem>>
    %22 = vector.broadcast %21 : f32 to vector<1x256xf32>
    %23 = arith.mulf %4, %22 : vector<1x256xf32>
    %24 = arith.addf %20, %23 : vector<1x256xf32>
    %c5_11 = arith.constant 5 : index
    %25 = memref.load %arg1[%c5_11] : memref<12xf32, #tpu.memory_space<smem>>
    %26 = vector.broadcast %25 : f32 to vector<1x256xf32>
    %27 = arith.mulf %5, %26 : vector<1x256xf32>
    %28 = arith.addf %24, %27 : vector<1x256xf32>
    %c0_12 = arith.constant 0 : index
    %29 = memref.load %arg2[%c0_12] : memref<2xf32, #tpu.memory_space<smem>>
    %30 = vector.broadcast %29 : f32 to vector<1x256xf32>
    %31 = arith.addf %28, %30 : vector<1x256xf32>
    %32 = arith.negf %31 : vector<1x256xf32>
    %33 = math.exp %32 : vector<1x256xf32>
    %cst = arith.constant 1.000000e+00 : f32
    %34 = vector.broadcast %cst : f32 to vector<1x256xf32>
    %35 = arith.addf %34, %33 : vector<1x256xf32>
    %36 = arith.divf %34, %35 : vector<1x256xf32>
    %c0_13 = arith.constant 0 : index
    %c0_14 = arith.constant 0 : index
    %37 = vector.load %arg4[%c0_13, %c0_14] : memref<2x256xf32, #tpu.memory_space<vmem>>, vector<1x256xf32>
    tpu.vector_store %arg4[%c0_13, %c0_14], %36 {strides = array<i32>} : memref<2x256xf32, #tpu.memory_space<vmem>>, vector<1x256xf32>,
    %c6 = arith.constant 6 : index
    %38 = memref.load %arg1[%c6] : memref<12xf32, #tpu.memory_space<smem>>
    %39 = vector.broadcast %38 : f32 to vector<1x256xf32>
    %40 = arith.mulf %0, %39 : vector<1x256xf32>
    %c7 = arith.constant 7 : index
    %41 = memref.load %arg1[%c7] : memref<12xf32, #tpu.memory_space<smem>>
    %42 = vector.broadcast %41 : f32 to vector<1x256xf32>
    %43 = arith.mulf %1, %42 : vector<1x256xf32>
    %44 = arith.addf %40, %43 : vector<1x256xf32>
    %c8 = arith.constant 8 : index
    %45 = memref.load %arg1[%c8] : memref<12xf32, #tpu.memory_space<smem>>
    %46 = vector.broadcast %45 : f32 to vector<1x256xf32>
    %47 = arith.mulf %2, %46 : vector<1x256xf32>
    %48 = arith.addf %44, %47 : vector<1x256xf32>
    %c9 = arith.constant 9 : index
    %49 = memref.load %arg1[%c9] : memref<12xf32, #tpu.memory_space<smem>>
    %50 = vector.broadcast %49 : f32 to vector<1x256xf32>
    %51 = arith.mulf %3, %50 : vector<1x256xf32>
    %52 = arith.addf %48, %51 : vector<1x256xf32>
    %c10 = arith.constant 10 : index
    %53 = memref.load %arg1[%c10] : memref<12xf32, #tpu.memory_space<smem>>
    %54 = vector.broadcast %53 : f32 to vector<1x256xf32>
    %55 = arith.mulf %4, %54 : vector<1x256xf32>
    %56 = arith.addf %52, %55 : vector<1x256xf32>
    %c11 = arith.constant 11 : index
    %57 = memref.load %arg1[%c11] : memref<12xf32, #tpu.memory_space<smem>>
    %58 = vector.broadcast %57 : f32 to vector<1x256xf32>
    %59 = arith.mulf %5, %58 : vector<1x256xf32>
    %60 = arith.addf %56, %59 : vector<1x256xf32>
    %c1_15 = arith.constant 1 : index
    %61 = memref.load %arg2[%c1_15] : memref<2xf32, #tpu.memory_space<smem>>
    %62 = vector.broadcast %61 : f32 to vector<1x256xf32>
    %63 = arith.addf %60, %62 : vector<1x256xf32>
    %64 = arith.negf %63 : vector<1x256xf32>
    %65 = math.exp %64 : vector<1x256xf32>
    %cst_16 = arith.constant 1.000000e+00 : f32
    %66 = vector.broadcast %cst_16 : f32 to vector<1x256xf32>
    %67 = arith.addf %66, %65 : vector<1x256xf32>
    %68 = arith.divf %66, %67 : vector<1x256xf32>
    %c1_17 = arith.constant 1 : index
    %c0_18 = arith.constant 0 : index
    %69 = vector.load %arg4[%c1_17, %c0_18] : memref<2x256xf32, #tpu.memory_space<vmem>>, vector<1x256xf32>
    tpu.vector_store %arg4[%c1_17, %c0_18], %68 {strides = array<i32>} : memref<2x256xf32, #tpu.memory_space<vmem>>, vector<1x256xf32>,
    return
  }
  func.func @transform_0(%arg0: i32) -> i32 {
    %c0_i32 = arith.constant 0 : i32
    %c0_i32_0 = arith.constant 0 : i32
    return %c0_i32 : i32
  }
  func.func @transform_1(%arg0: i32) -> i32 {
    %c0_i32 = arith.constant 0 : i32
    %c0_i32_0 = arith.constant 0 : i32
    return %c0_i32 : i32
  }
  func.func @transform_2(%arg0: i32) -> (i32, i32) {
    %c0_i32 = arith.constant 0 : i32
    %c0_i32_0 = arith.constant 0 : i32
    return %c0_i32, %arg0 : i32, i32
  }
  func.func @transform_3(%arg0: i32) -> (i32, i32) {
    %c0_i32 = arith.constant 0 : i32
    %c0_i32_0 = arith.constant 0 : i32
    return %c0_i32, %arg0 : i32, i32
  }
}

</mosaic_0001>

<llo_original>
// kernel: tpu_custom_call.1
$region0: #{tpu_custom_call.1}
  #allocation0 [shape = 'u32[]', space=smem, size = 0x4, offset = 0x4, fixed_abs, tag = 'smem constant byte address 0x4 - core index']
  #allocation1 [shape = 'u32[144,128]{1,0:T(1,128)}', space=vmem, size = 0x12000, scoped, tag = 'internal scratch']
  %s0 = inlined_call_operand.hbm [shape: f32[12], index: 0, kind: input, shape index: {}]
  %s1 = inlined_call_operand.vmem [shape: f32[2], index: 1, kind: input, shape index: {}]
  %s2 = inlined_call_operand.hbm [shape: f32[6,1024], index: 2, kind: input, shape index: {}]
  %s3 = inlined_call_operand.hbm [shape: f32[2,1024], index: 3, kind: output, shape index: {}]
  %s4 = sld [smem:[#allocation0]]
  $region57: #{tpu_custom_call.1} parent=0
    _
  %s6 = ssub.s32 1, %s4
  %s7 = scalar_select 0, %s6, %s4
  $region1: #{tpu_custom_call.1} parent=0
    #allocation2 [shape = 'u8[512]{0}', space=smem, size = 0x200, scoped, tag = 'input window, operand 0, single buffered']
    #allocation3 [shape = 's32[2]{0}', space=sflag, size = 0x8, scoped, tag = 'scoped memory for tpu_custom_call.1']
    #allocation4 [shape = 's32[2]{0}', space=sflag, size = 0x8, scoped, tag = 'scoped memory for tpu_custom_call.1']
    #allocation5 [shape = 's32[2]{0}', space=sflag, size = 0x8, scoped, tag = 'scoped memory for tpu_custom_call.1']
    #allocation6 [shape = 's32[2]{0}', space=sflag, size = 0x8, scoped, tag = 'scoped memory for tpu_custom_call.1']
    #allocation7 [shape = 'u8[512]{0}', space=smem, size = 0x200, scoped, tag = 'input window, operand 1, single buffered']
    #allocation8 [shape = 'u8[16384]{0}', space=vmem, size = 0x4000, scoped, tag = 'input window, operand 2']
    #allocation9 [shape = 'u8[4096]{0}', space=vmem, size = 0x1000, scoped, tag = 'output window, operand 0']
    %8 = vsyncpa [#allocation5], 0
    %9 = vsyncpa [#allocation6], 0
    %10 = vsyncpa [#allocation3], 0
    %s11 = scalar_lea.sflag [#allocation3], 1
    %12 = vsyncpa %s11, 0
    %13 = vsyncpa [#allocation4], 0
    %s14 = scalar_lea.sflag [#allocation4], 1
    %15 = vsyncpa %s14, 0
    loop: start=0, step=1, limit=6
    $region2: #{tpu_custom_call.1} parent=1 // loop_pre_header
      _
    $region3: #{tpu_custom_call.1} parent=1 // loop_header
      %s17 = sphi 0, %s21
      %p18 = scmp.ge.s32.totalorder %s17, 6
      %s25 = sphi 0, %s25
      %s27 = sphi 0, %s25
      %s28 = sphi 0, %s27
      %s42 = sphi 0, %s28
      %s46 = sphi 0, %s46
      %s48 = sphi 0, %s46
      %s49 = sphi 0, %s48
      %s63 = sphi 0, %s49
      %s69 = sphi 0, %s71
      %s72 = sphi 0, %s69
      %s73 = sphi 0, %s72
      %s89 = sphi 0, %s73
      %s95 = sphi 0, %s97
      %s98 = sphi 0, %s95
      %s99 = sphi 0, %s98
      %s115 = sphi 0, %s99
    $region4: #{tpu_custom_call.1} parent=1 // loop_header_branch
      %20 = sbr.rel (%p18) target = $region8
    $region5: #{tpu_custom_call.1} parent=1 // loop_body
      %s22 = ssub.s32 %s17, 1
      %s23 = ssub.s32 %s17, 2
      %s24 = sadd.s32 %s17, 1
      %s26 = sadd.s32 %s25, 1
      %p29 = scmp.eq.s32.totalorder %s17, 3
      %p30 = scmp.ne.s32.totalorder %s25, %s27
      %p31 = scmp.eq.s32.totalorder %s17, 0
      %p32 = por %p30, %p31
      %p33 = scmp.ne.s32.totalorder %s25, %s27
      %p34 = scmp.eq.s32.totalorder %s22, 3
      %p35 = por %p33, %p34
      %p36 = scmp.ne.s32.totalorder %s27, %s28
      %p37 = scmp.eq.s32.totalorder %s22, 0
      %p38 = por %p36, %p37
      %p39 = scmp.ne.s32.totalorder %s27, %s28
      %p40 = scmp.eq.s32.totalorder %s23, 3
      %p41 = por %p39, %p40
      %p43 = scmp.ne.s32.totalorder %s28, %s42
      %p44 = scmp.eq.s32.totalorder %s23, 0
      %p45 = por %p43, %p44
      %s47 = sadd.s32 %s46, 1
      %p50 = scmp.eq.s32.totalorder %s17, 3
      %p51 = scmp.ne.s32.totalorder %s46, %s48
      %p52 = scmp.eq.s32.totalorder %s17, 0
      %p53 = por %p51, %p52
      %p54 = scmp.ne.s32.totalorder %s46, %s48
      %p55 = scmp.eq.s32.totalorder %s22, 3
      %p56 = por %p54, %p55
      %p57 = scmp.ne.s32.totalorder %s48, %s49
      %p58 = scmp.eq.s32.totalorder %s22, 0
      %p59 = por %p57, %p58
      %p60 = scmp.ne.s32.totalorder %s48, %s49
      %p61 = scmp.eq.s32.totalorder %s23, 3
      %p62 = por %p60, %p61
      %p64 = scmp.ne.s32.totalorder %s49, %s63
      %p65 = scmp.eq.s32.totalorder %s23, 0
      %p66 = por %p64, %p65
      %s67 = ssub.s32 %s17, %s24
      %p68 = scmp.eq.s32.totalorder %s67, 0
      %s70 = sadd.s32 %s69, 1
      %s71 = scalar_select %p68, %s69, %s70
      %p74 = pneg %p68
      %p75 = scmp.eq.s32.totalorder %s17, 3
      %p76 = por %p74, %p75
      %p77 = scmp.ne.s32.totalorder %s69, %s72
      %p78 = scmp.eq.s32.totalorder %s17, 0
      %p79 = por %p77, %p78
      %p80 = scmp.ne.s32.totalorder %s69, %s72
      %p81 = scmp.eq.s32.totalorder %s22, 3
      %p82 = por %p80, %p81
      %p83 = scmp.ne.s32.totalorder %s72, %s73
      %p84 = scmp.eq.s32.totalorder %s22, 0
      %p85 = por %p83, %p84
      %p86 = scmp.ne.s32.totalorder %s72, %s73
      %p87 = scmp.eq.s32.totalorder %s23, 3
      %p88 = por %p86, %p87
      %p90 = scmp.ne.s32.totalorder %s73, %s89
      %p91 = scmp.eq.s32.totalorder %s23, 0
      %p92 = por %p90, %p91
      %s93 = ssub.s32 %s17, %s24
      %p94 = scmp.eq.s32.totalorder %s93, 0
      %s96 = sadd.s32 %s95, 1
      %s97 = scalar_select %p94, %s95, %s96
      %p100 = pneg %p94
      %p101 = scmp.eq.s32.totalorder %s17, 3
      %p102 = por %p100, %p101
      %p103 = scmp.ne.s32.totalorder %s95, %s98
      %p104 = scmp.eq.s32.totalorder %s17, 0
      %p105 = por %p103, %p104
      %p106 = scmp.ne.s32.totalorder %s95, %s98
      %p107 = scmp.eq.s32.totalorder %s22, 3
      %p108 = por %p106, %p107
      %p109 = scmp.ne.s32.totalorder %s98, %s99
      %p110 = scmp.eq.s32.totalorder %s22, 0
      %p111 = por %p109, %p110
      %p112 = scmp.ne.s32.totalorder %s98, %s99
      %p113 = scmp.eq.s32.totalorder %s23, 3
      %p114 = por %p112, %p113
      %p116 = scmp.ne.s32.totalorder %s99, %s115
      %p117 = scmp.eq.s32.totalorder %s23, 0
      %p118 = por %p116, %p117
      %p119 = scmp.le.s32.totalorder 1, %s17
      %p120 = scmp.lt.s32.totalorder %s17, 5
      %p121 = pnand %p119, %p120
      %p122 = pneg %p121
      // Predicated region
      $region9: #{tpu_custom_call.1} parent=5 // pred_check
        _
      $region10: #{tpu_custom_call.1} parent=5 // pred_check_branch
        %124 = sbr.rel (%p121) target = $region12
      $region11: #{tpu_custom_call.1} parent=5 // pred_region
        %s125 = ssub.s32 %s17, 1
        // Predicated region
        $region13: #{tpu_custom_call.1} parent=11 // pred_check
          %p126 = pneg %p38
        $region14: #{tpu_custom_call.1} parent=11 // pred_check_branch
          %128 = sbr.rel (%p126) target = $region16
        $region15: #{tpu_custom_call.1} parent=11 // pred_region
          %s130 = ssub.s32 16, 16
          %131 = vsyncadd [#allocation5], %s130
          %134 = dma.hbm_to_smem %s0, 16, [#allocation2], [#allocation5]
        $region16: #{tpu_custom_call.1} parent=11 // pred_fallthru
          _
        // Predicated region
        $region17: #{tpu_custom_call.1} parent=11 // pred_check
          %p135 = pneg %p59
        $region18: #{tpu_custom_call.1} parent=11 // pred_check_branch
          %137 = sbr.rel (%p135) target = $region20
        $region19: #{tpu_custom_call.1} parent=11 // pred_region
          %s139 = ssub.s32 16, 16
          %140 = vsyncadd [#allocation6], %s139
          %s142 = sshll.u32 %s1, 4
          %s143 = int_to_ptr.vmem [resolvable:$true] %s142
          %145 = dma.vmem_to_smem %s143, 16, [#allocation7], [#allocation6]
        $region20: #{tpu_custom_call.1} parent=11 // pred_fallthru
          _
      $region12: #{tpu_custom_call.1} parent=5 // pred_fallthru
        _
      %p146 = scmp.lt.s32.totalorder %s17, 4
      // Predicated region
      $region21: #{tpu_custom_call.1} parent=5 // pred_check
        %p147 = pneg %p146
      $region22: #{tpu_custom_call.1} parent=5 // pred_check_branch
        %149 = sbr.rel (%p147) target = $region24
      $region23: #{tpu_custom_call.1} parent=5 // pred_region
        // Predicated region
        $region25: #{tpu_custom_call.1} parent=23 // pred_check
          %p150 = pneg %p79
        $region26: #{tpu_custom_call.1} parent=23 // pred_check_branch
          %152 = sbr.rel (%p150) target = $region28
        $region27: #{tpu_custom_call.1} parent=23 // pred_region
          %s153 = sand.u32 %s69, 1
          %s154 = scalar_lea.sflag [#allocation3], %s153
          %s155 = sand.u32 %s69, 1
          %s156 = smul.addr %s155, 16
          %s157 = scalar_lea.vmem [#allocation8], %s156
          %s158 = smul.u32 2, %s17
          %s160 = ssub.s32 256, 256
          %161 = vsyncadd %s154, %s160
          %s162 = smul.addr %s158, 128
          %s163 = scalar_lea.hbm %s2, %s162
          %s165 = sshll.u32 %s157, 4
          %s166 = int_to_ptr.vmem [resolvable:$true] %s165
          %168 = dma.hbm_to_vmem [thread:$0]  %s163, 256, %s166, %s154
        $region28: #{tpu_custom_call.1} parent=23 // pred_fallthru
          _
      $region24: #{tpu_custom_call.1} parent=5 // pred_fallthru
        _
      %p169 = scmp.le.s32.totalorder 1, %s17
      %p170 = scmp.lt.s32.totalorder %s17, 5
      %p171 = pnand %p169, %p170
      %p172 = pneg %p171
      // Predicated region
      $region29: #{tpu_custom_call.1} parent=5 // pred_check
        _
      $region30: #{tpu_custom_call.1} parent=5 // pred_check_branch
        %174 = sbr.rel (%p171) target = $region32
      $region31: #{tpu_custom_call.1} parent=5 // pred_region
        %s175 = ssub.s32 %s17, 1
        // Predicated region
        $region33: #{tpu_custom_call.1} parent=31 // pred_check
          %p176 = pneg %p38
        $region34: #{tpu_custom_call.1} parent=31 // pred_check_branch
          %178 = sbr.rel (%p176) target = $region36
        $region35: #{tpu_custom_call.1} parent=31 // pred_region
          %179 = dma.done [#allocation5], 16
        $region36: #{tpu_custom_call.1} parent=31 // pred_fallthru
          _
        // Predicated region
        $region37: #{tpu_custom_call.1} parent=31 // pred_check
          %p180 = pneg %p59
        $region38: #{tpu_custom_call.1} parent=31 // pred_check_branch
          %182 = sbr.rel (%p180) target = $region40
        $region39: #{tpu_custom_call.1} parent=31 // pred_region
          %183 = dma.done [#allocation6], 16
        $region40: #{tpu_custom_call.1} parent=31 // pred_fallthru
          _
        %s184 = sand.u32 %s72, 1
        %s185 = scalar_lea.sflag [#allocation3], %s184
        %s186 = sand.u32 %s72, 1
        %s187 = smul.addr %s186, 16
        %s188 = scalar_lea.vmem [#allocation8], %s187
        // Predicated region
        $region41: #{tpu_custom_call.1} parent=31 // pred_check
          %p189 = pneg %p85
        $region42: #{tpu_custom_call.1} parent=31 // pred_check_branch
          %191 = sbr.rel (%p189) target = $region44
        $region43: #{tpu_custom_call.1} parent=31 // pred_region
          %192 = dma.done %s185, 256
        $region44: #{tpu_custom_call.1} parent=31 // pred_fallthru
          _
        %193 = sfence
        %p194 = pneg %p38
        %p195 = pneg %p35
        %p196 = pneg %p59
        %p197 = pneg %p56
        %s198 = sand.u32 %s72, 1
        %s199 = scalar_lea.sflag [#allocation3], %s198
        %s200 = sand.u32 %s72, 1
        %s201 = smul.addr %s200, 16
        %s202 = scalar_lea.vmem [#allocation8], %s201
        %p203 = pneg %p85
        %p204 = pneg %p82
        %p205 = pneg %p111
        %p206 = pneg %p108
        %s207 = sand.u32 %s98, 1
        %s208 = scalar_lea.sflag [#allocation4], %s207
        %s209 = sand.u32 %s98, 1
        %s210 = smul.addr %s209, 4
        %s211 = scalar_lea.vmem [#allocation9], %s210
        %s212 = smul.u32 2, %s22
        %s213 = smul.u32 2, %s22
        %v214 = vld [vmem:[%s188] ss:$8 sm:$0x3]
        %s215 = scalar_lea.vmem %s188, 1 [#allocation8]
        %v216 = vld [vmem:[%s215] ss:$8 sm:$0x3]
        %s217 = scalar_lea.vmem %s188, 2 [#allocation8]
        %v218 = vld [vmem:[%s217] ss:$8 sm:$0x3]
        %s219 = scalar_lea.vmem %s188, 3 [#allocation8]
        %v220 = vld [vmem:[%s219] ss:$8 sm:$0x3]
        %s221 = scalar_lea.vmem %s188, 4 [#allocation8]
        %v222 = vld [vmem:[%s221] ss:$8 sm:$0x3]
        %s223 = scalar_lea.vmem %s188, 5 [#allocation8]
        %v224 = vld [vmem:[%s223] ss:$8 sm:$0x3]
        %s225 = sld [smem:[#allocation2]]
        %v226 = vstv %s225
        %v227 = vmul.f32 %v214, %v226
        %s228 = sld [smem:[#allocation2 + $0x1]]
        %v229 = vstv %s228
        %v230 = vmul.f32 %v216, %v229
        %v231 = vadd.f32 %v227, %v230
        %s232 = sld [smem:[#allocation2 + $0x2]]
        %v233 = vstv %s232
        %v234 = vmul.f32 %v218, %v233
        %v235 = vadd.f32 %v231, %v234
        %s236 = sld [smem:[#allocation2 + $0x3]]
        %v237 = vstv %s236
        %v238 = vmul.f32 %v220, %v237
        %v239 = vadd.f32 %v235, %v238
        %s240 = sld [smem:[#allocation2 + $0x4]]
        %v241 = vstv %s240
        %v242 = vmul.f32 %v222, %v241
        %v243 = vadd.f32 %v239, %v242
        %s244 = sld [smem:[#allocation2 + $0x5]]
        %v245 = vstv %s244
        %v246 = vmul.f32 %v224, %v245
        %v247 = vadd.f32 %v243, %v246
        %s248 = sld [smem:[#allocation7]]
        %v249 = vstv %s248
        %v250 = vadd.f32 %v247, %v249
        %v251 = vxor.u32 %v250, 2147483648
        %v252 = vmul.f32 %v251, 1.442695
        %v253 = vpow.pop %v252
        %v254 = vadd.f32 %v253, 1.0
        %v255 = vrcp.pop %v254
        %v256 = vmul.f32 1.0, %v255
        %v257 = vlaneseq
        %vm258 = vcmp.ge.s32.totalorder %v257, 0
        %vm259 = vcmp.lt.s32.totalorder %v257, 256
        %vm260 = vmand %vm258, %vm259
        %261 = vst.msk [vmem:[%s211] ss:$2 sm:$0x3] %vm260, %v256
        %s262 = sld [smem:[#allocation2 + $0x6]]
        %v263 = vstv %s262
        %v264 = vmul.f32 %v214, %v263
        %s265 = sld [smem:[#allocation2 + $0x7]]
        %v266 = vstv %s265
        %v267 = vmul.f32 %v216, %v266
        %v268 = vadd.f32 %v264, %v267
        %s269 = sld [smem:[#allocation2 + $0x8]]
        %v270 = vstv %s269
        %v271 = vmul.f32 %v218, %v270
        %v272 = vadd.f32 %v268, %v271
        %s273 = sld [smem:[#allocation2 + $0x9]]
        %v274 = vstv %s273
        %v275 = vmul.f32 %v220, %v274
        %v276 = vadd.f32 %v272, %v275
        %s277 = sld [smem:[#allocation2 + $0xa]]
        %v278 = vstv %s277
        %v279 = vmul.f32 %v222, %v278
        %v280 = vadd.f32 %v276, %v279
        %s281 = sld [smem:[#allocation2 + $0xb]]
        %v282 = vstv %s281
        %v283 = vmul.f32 %v224, %v282
        %v284 = vadd.f32 %v280, %v283
        %s285 = sld [smem:[#allocation7 + $0x1]]
        %v286 = vstv %s285
        %v287 = vadd.f32 %v284, %v286
        %v288 = vxor.u32 %v287, 2147483648
        %v289 = vmul.f32 %v288, 1.442695
        %v290 = vpow.pop %v289
        %v291 = vadd.f32 %v290, 1.0
        %v292 = vrcp.pop %v291
        %v293 = vmul.f32 1.0, %v292
        %s294 = scalar_lea.vmem %s211, 1 [#allocation9]
        %295 = vst.msk [vmem:[%s294] ss:$2 sm:$0x3] %vm260, %v293
        %s296 = sand.u32 %s98, 1
        %s297 = scalar_lea.sflag [#allocation4], %s296
        %s298 = sand.u32 %s98, 1
        %s299 = smul.addr %s298, 4
        %s300 = scalar_lea.vmem [#allocation9], %s299
        // Predicated region
        $region45: #{tpu_custom_call.1} parent=31 // pred_check
          %p301 = pneg %p108
        $region46: #{tpu_custom_call.1} parent=31 // pred_check_branch
          %303 = sbr.rel (%p301) target = $region48
        $region47: #{tpu_custom_call.1} parent=31 // pred_region
          %s304 = smul.u32 2, %s22
          %s306 = ssub.s32 64, 64
          %307 = vsyncadd %s297, %s306
          %s308 = smul.addr %s304, 32
          %s309 = scalar_lea.hbm %s3, %s308
          %s311 = sshll.u32 %s300, 4
          %s312 = int_to_ptr.vmem [resolvable:$true] %s311
          %314 = dma.vmem_to_hbm [thread:$0]  %s312, 64, %s309, %s297
        $region48: #{tpu_custom_call.1} parent=31 // pred_fallthru
          _
      $region32: #{tpu_custom_call.1} parent=5 // pred_fallthru
        _
      %p315 = scmp.le.s32.totalorder 2, %s17
      // Predicated region
      $region49: #{tpu_custom_call.1} parent=5 // pred_check
        %p316 = pneg %p315
      $region50: #{tpu_custom_call.1} parent=5 // pred_check_branch
        %318 = sbr.rel (%p316) target = $region52
      $region51: #{tpu_custom_call.1} parent=5 // pred_region
        %s319 = ssub.s32 %s17, 2
        // Predicated region
        $region53: #{tpu_custom_call.1} parent=51 // pred_check
          %p320 = pneg %p114
        $region54: #{tpu_custom_call.1} parent=51 // pred_check_branch
          %322 = sbr.rel (%p320) target = $region56
        $region55: #{tpu_custom_call.1} parent=51 // pred_region
          %s323 = sand.u32 %s99, 1
          %s324 = scalar_lea.sflag [#allocation4], %s323
          %s325 = sand.u32 %s99, 1
          %s326 = smul.addr %s325, 4
          %s327 = scalar_lea.vmem [#allocation9], %s326
          %328 = dma.done %s324, 64
        $region56: #{tpu_custom_call.1} parent=51 // pred_fallthru
          _
      $region52: #{tpu_custom_call.1} parent=5 // pred_fallthru
        _
    $region6: #{tpu_custom_call.1} parent=1 // loop_footer
      %s21 = sadd.s32 1, %s17
    $region7: #{tpu_custom_call.1} parent=1 // loop_footer_branch
      %16 = sbr.rel target = $region3
    $region8: #{tpu_custom_call.1} parent=1 // loop_exit
      _
    %329 = vsyncpa [#allocation3], 1
    %s330 = scalar_lea.sflag [#allocation3], 1
    %331 = vsyncpa %s330, 1
    %332 = vsyncpa [#allocation4], 1
    %s333 = scalar_lea.sflag [#allocation4], 1
    %334 = vsyncpa %s333, 1
    %335 = vsyncpa [#allocation5], 1
    %s336 = scalar_lea.sflag [#allocation5], 1
    %337 = vsyncpa %s336, 1
    %338 = vsyncpa [#allocation6], 1
    %s339 = scalar_lea.sflag [#allocation6], 1
    %340 = vsyncpa %s339, 1

</llo_original>
